<compile_context>
chip_gen: v6e
topology: v6e:2x2x1
jax: 0.10.0
libtpu: 0.0.40
codegen_flags: <defaults>
</compile_context>

<pallas_src>
import jax
import jax.numpy as jnp
from jax.experimental import pallas as pl
from jax.experimental.pallas import tpu as pltpu

D_IN, D_OUT = 768, 512  # fixed by nn.Linear(768, 512)

_VMEM_SPEC = pl.BlockSpec(memory_space=pltpu.MemorySpace.VMEM)


def precompute_prompt_projection(prompt_raw, affine_w, affine_b):
    """relu(prompt @ W + b): frozen prompt + frozen Linear -> fold once, reuse forever."""
    return jax.nn.relu(prompt_raw @ affine_w + affine_b[None, :]).astype(jnp.float32)


def _prompt_attention(prompt, img):
    """Shared attention body. prompt: (P, 512), img: (1, 512) -> (1, 512)."""
    # c_t[p] = <prompt[p], image_features>  -- VPU broadcast-mul + lane (XLU) reduce
    scores = jnp.sum(prompt * img, axis=1, keepdims=True)               # (P, 1)
    # softmax over the prompt axis (torch F.softmax implicit dim=0 on 3-D c_t)
    m = jnp.max(scores, axis=0, keepdims=True)                          # (1, 1)
    e = jnp.exp(scores - m)
    inv = pl.reciprocal(jnp.sum(e, axis=0, keepdims=True), approx=True)  # EUP slot
    alpha = e * inv                                                      # (P, 1)
    # weighted sum over prompts + residual image feature
    return jnp.sum(alpha * prompt, axis=0, keepdims=True) + img          # (1, 512)


def _visual_extractor_kernel(prompt_ref, img_ref, out_ref):
    # prompt_ref: (P, 512) precomputed relu-projection;  img_ref / out_ref: (1, 512)
    out_ref[...] = _prompt_attention(prompt_ref[...], img_ref[...])


def _visual_extractor_fused_kernel(prompt_ref, w_ref, b_ref, img_ref, out_ref):
    # prompt_ref: (P, 768) raw prompt; w_ref: (768, 512); b_ref: (1, 512); img/out: (1, 512)
    proj = jnp.dot(prompt_ref[...], w_ref[...], preferred_element_type=jnp.float32)
    proj = jnp.maximum(proj + b_ref[...], 0.0)                           # relu(affine(prompt))
    out_ref[...] = _prompt_attention(proj, img_ref[...])


def visual_extractor_forward(prompt_proj, image_features):
    """Fast path: prompt_proj (P, 512) f32 precomputed projection; image_features (1, 512) f32."""
    _, d = prompt_proj.shape
    return pl.pallas_call(
        _visual_extractor_kernel,
        out_shape=jax.ShapeDtypeStruct((1, d), jnp.float32),
        in_specs=[_VMEM_SPEC, _VMEM_SPEC],
        out_specs=_VMEM_SPEC,
    )(prompt_proj, image_features)


def visual_extractor_forward_fused(prompt_raw, affine_w, affine_b, image_features):
    """Fully-fused path: relu(affine(prompt)) computed on the MXU inside the kernel."""
    return pl.pallas_call(
        _visual_extractor_fused_kernel,
        out_shape=jax.ShapeDtypeStruct((1, D_OUT), jnp.float32),
        in_specs=[_VMEM_SPEC, _VMEM_SPEC, _VMEM_SPEC, _VMEM_SPEC],
        out_specs=_VMEM_SPEC,
    )(prompt_raw, affine_w, affine_b.reshape(1, D_OUT), image_features)


def _reference(prompt_raw, affine_w, affine_b, image_features):
    prompt = jax.nn.relu(prompt_raw @ affine_w + affine_b[None, :])   # (P, 512)
    scores = prompt @ image_features.T                                # (P, 1)
    alpha = jax.nn.softmax(scores, axis=0)                            # softmax over prompts
    sum_a = jnp.sum(alpha * prompt, axis=0, keepdims=True)            # (1, 512)
    return sum_a + image_features


if __name__ == "__main__":
    key = jax.random.PRNGKey(0)
    P = 8  # small prompt count

    k1, k2, k3, k4 = jax.random.split(key, 4)
    prompt_raw = jax.random.normal(k1, (P, D_IN), dtype=jnp.float32) * 0.05
    affine_w = jax.random.normal(k2, (D_IN, D_OUT), dtype=jnp.float32) * 0.02
    affine_b = jax.random.normal(k3, (D_OUT,), dtype=jnp.float32) * 0.02
    image_features = jax.random.normal(k4, (1, D_OUT), dtype=jnp.float32)

    ref = _reference(prompt_raw, affine_w, affine_b, image_features)

    # Fast path: one-time constant folding of the frozen affine+ReLU.
    prompt_proj = jax.block_until_ready(
        precompute_prompt_projection(prompt_raw, affine_w, affine_b)
    )
    out = jax.block_until_ready(visual_extractor_forward(prompt_proj, image_features))

    # Fully-fused path (same semantics, projection inside the kernel).
    out_fused = jax.block_until_ready(
        visual_extractor_forward_fused(prompt_raw, affine_w, affine_b, image_features)
    )

    assert out.shape == (1, D_OUT) and out.dtype == jnp.float32
    # approx reciprocal in the softmax denom -> slightly looser tolerance than pure f32
    assert jnp.allclose(out, ref, atol=1e-3, rtol=1e-3), float(jnp.max(jnp.abs(out - ref)))
    assert jnp.allclose(out_fused, ref, atol=1e-3, rtol=1e-3), float(
        jnp.max(jnp.abs(out_fused - ref))
    )
    print("KERNEL_OK")
</pallas_src>

<mosaic_0001>
module attributes {stable_mosaic.version = 11 : i64} {
  func.func @_visual_extractor_kernel(%arg0: memref<8x512xf32, #tpu.memory_space<vmem>>, %arg1: memref<1x512xf32, #tpu.memory_space<vmem>>, %arg2: memref<1x512xf32, #tpu.memory_space<vmem>>) attributes {dimension_semantics = [], scalar_prefetch = 0 : i64, scratch_operands = 0 : i64, tpu.core_type = #tpu.core_type<tc>} {
    %c0 = arith.constant 0 : index
    %c0_0 = arith.constant 0 : index
    %0 = vector.load %arg0[%c0, %c0_0] : memref<8x512xf32, #tpu.memory_space<vmem>>, vector<8x512xf32>
    %c0_1 = arith.constant 0 : index
    %c0_2 = arith.constant 0 : index
    %1 = vector.load %arg1[%c0_1, %c0_2] : memref<1x512xf32, #tpu.memory_space<vmem>>, vector<1x512xf32>
    %2 = vector.broadcast %1 : vector<1x512xf32> to vector<8x512xf32>
    %3 = arith.mulf %0, %2 : vector<8x512xf32>
    %cst = arith.constant dense<0.000000e+00> : vector<8xf32>
    %4 = vector.multi_reduction <add>, %3, %cst [1] : vector<8x512xf32> to vector<8xf32>
    %5 = vector.shape_cast %4 : vector<8xf32> to vector<8x1xf32>
    %cst_3 = arith.constant dense<0xFF800000> : vector<1xf32>
    %6 = vector.multi_reduction <maximumf>, %5, %cst_3 [0] : vector<8x1xf32> to vector<1xf32>
    %7 = vector.shape_cast %6 : vector<1xf32> to vector<1x1xf32>
    %8 = vector.broadcast %7 : vector<1x1xf32> to vector<8x1xf32>
    %9 = arith.subf %5, %8 : vector<8x1xf32>
    %10 = math.exp %9 : vector<8x1xf32>
    %cst_4 = arith.constant dense<0.000000e+00> : vector<1xf32>
    %11 = vector.multi_reduction <add>, %10, %cst_4 [0] : vector<8x1xf32> to vector<1xf32>
    %12 = vector.shape_cast %11 : vector<1xf32> to vector<1x1xf32>
    %13 = tpu.reciprocal %12 {approx = true} : vector<1x1xf32> -> vector<1x1xf32>
    %14 = vector.broadcast %13 : vector<1x1xf32> to vector<8x1xf32>
    %15 = arith.mulf %10, %14 : vector<8x1xf32>
    %16 = vector.broadcast %15 : vector<8x1xf32> to vector<8x512xf32>
    %17 = arith.mulf %16, %0 : vector<8x512xf32>
    %cst_5 = arith.constant dense<0.000000e+00> : vector<512xf32>
    %18 = vector.multi_reduction <add>, %17, %cst_5 [0] : vector<8x512xf32> to vector<512xf32>
    %19 = vector.shape_cast %18 : vector<512xf32> to vector<1x512xf32>
    %20 = arith.addf %19, %1 : vector<1x512xf32>
    %c0_6 = arith.constant 0 : index
    %c0_7 = arith.constant 0 : index
    %21 = vector.load %arg2[%c0_6, %c0_7] : memref<1x512xf32, #tpu.memory_space<vmem>>, vector<1x512xf32>
    tpu.vector_store %arg2[%c0_6, %c0_7], %20 {strides = array<i32>} : memref<1x512xf32, #tpu.memory_space<vmem>>, vector<1x512xf32>,
    return
  }
}

</mosaic_0001>

<llo_original>
// kernel: tpu_custom_call.1
$region0: #{tpu_custom_call.1}
  #allocation0 [shape = 'u32[]', space=smem, size = 0x4, offset = 0x4, fixed_abs, tag = 'smem constant byte address 0x4 - core index']
  #allocation1 [shape = 'u32[144,128]{1,0:T(1,128)}', space=vmem, size = 0x12000, scoped, tag = 'internal scratch']
  %s0 = inlined_call_operand.hbm [shape: f32[8,512], index: 0, kind: input, shape index: {}]
  %s1 = inlined_call_operand.hbm [shape: f32[1,512], index: 1, kind: input, shape index: {}]
  %s2 = inlined_call_operand.hbm [shape: f32[1,512], index: 2, kind: output, shape index: {}]
  %s3 = sld [smem:[#allocation0]]
  $region26: #{tpu_custom_call.1} parent=0
    _
  %s5 = ssub.s32 1, %s3
  %s6 = scalar_select 0, %s5, %s3
  $region1: #{tpu_custom_call.1} parent=0
    #allocation2 [shape = 'u8[16384]{0}', space=vmem, size = 0x4000, scoped, tag = 'input window, operand 0, single buffered']
    #allocation3 [shape = 's32[1]{0}', space=sflag, size = 0x4, scoped, tag = 'scoped memory for tpu_custom_call.1']
    #allocation4 [shape = 's32[1]{0}', space=sflag, size = 0x4, scoped, tag = 'scoped memory for tpu_custom_call.1']
    #allocation5 [shape = 'u8[2048]{0}', space=vmem, size = 0x800, scoped, tag = 'input window, operand 1, single buffered']
    #allocation6 [shape = 's32[1]{0}', space=sflag, size = 0x4, scoped, tag = 'scoped memory for tpu_custom_call.1']
    #allocation7 [shape = 'u8[2048]{0}', space=vmem, size = 0x800, scoped, tag = 'output window, operand 0, single buffered']
    %7 = vsyncpa [#allocation3], 0
    %8 = vsyncpa [#allocation6], 0
    %9 = vsyncpa [#allocation4], 0
    // Predicated region
    $region2: #{tpu_custom_call.1} parent=1 // pred_check
      _
    $region3: #{tpu_custom_call.1} parent=1 // pred_check_branch
      %11 = sbr.rel (0) target = $region5
    $region4: #{tpu_custom_call.1} parent=1 // pred_region
      %s13 = ssub.s32 512, 512
      %14 = vsyncadd [#allocation3], %s13
      %s16 = sshll.u32 [#allocation2], 4
      %s17 = int_to_ptr.vmem [resolvable:$true] %s16
      %19 = dma.hbm_to_vmem [thread:$0]  %s0, 512, %s17, [#allocation3]
    $region5: #{tpu_custom_call.1} parent=1 // pred_fallthru
      _
    // Predicated region
    $region6: #{tpu_custom_call.1} parent=1 // pred_check
      _
    $region7: #{tpu_custom_call.1} parent=1 // pred_check_branch
      %21 = sbr.rel (0) target = $region9
    $region8: #{tpu_custom_call.1} parent=1 // pred_region
      %s23 = ssub.s32 64, 64
      %24 = vsyncadd [#allocation6], %s23
      %s26 = sshll.u32 [#allocation5], 4
      %s27 = int_to_ptr.vmem [resolvable:$true] %s26
      %29 = dma.hbm_to_vmem [thread:$0]  %s1, 64, %s27, [#allocation6]
    $region9: #{tpu_custom_call.1} parent=1 // pred_fallthru
      _
    // Predicated region
    $region10: #{tpu_custom_call.1} parent=1 // pred_check
      _
    $region11: #{tpu_custom_call.1} parent=1 // pred_check_branch
      %31 = sbr.rel (0) target = $region13
    $region12: #{tpu_custom_call.1} parent=1 // pred_region
      %32 = dma.done [#allocation3], 512
    $region13: #{tpu_custom_call.1} parent=1 // pred_fallthru
      _
    // Predicated region
    $region14: #{tpu_custom_call.1} parent=1 // pred_check
      _
    $region15: #{tpu_custom_call.1} parent=1 // pred_check_branch
      %34 = sbr.rel (0) target = $region17
    $region16: #{tpu_custom_call.1} parent=1 // pred_region
      %35 = dma.done [#allocation6], 64
    $region17: #{tpu_custom_call.1} parent=1 // pred_fallthru
      _
    %v36 = vld [vmem:[#allocation2] sm:$0xff]
    %v37 = vld [vmem:[#allocation2 + $0x8] sm:$0xff]
    %v38 = vld [vmem:[#allocation2 + $0x10] sm:$0xff]
    %v39 = vld [vmem:[#allocation2 + $0x18] sm:$0xff]
    %v40 = vld [vmem:[#allocation5] sm:$0xf]
    %v42 = vlaneseq
    %v43 = vshrl.u32 %v42, 7
    %v44 = vsub.s32 0, %v43
    %v45 = vrot.slane %v40, %v44
    %v46 = vlaneseq
    %v47 = vshrl.u32 %v46, 7
    %v48 = vsub.s32 1, %v47
    %v49 = vrot.slane %v40, %v48
    %v50 = vlaneseq
    %v51 = vshrl.u32 %v50, 7
    %v52 = vsub.s32 2, %v51
    %v53 = vrot.slane %v40, %v52
    %v54 = vlaneseq
    %v55 = vshrl.u32 %v54, 7
    %v56 = vsub.s32 3, %v55
    %v57 = vrot.slane %v40, %v56
    %v62 = vmul.f32 %v36, %v45
    %v63 = vmul.f32 %v37, %v49
    %v64 = vmul.f32 %v38, %v53
    %v65 = vmul.f32 %v39, %v57
    %v66 = vadd.f32 %v62, %v63
    %v67 = vadd.f32 %v66, %v64
    %v68 = vadd.f32 %v67, %v65
    %69 = vadd.xlane.f32.xlu0 %v68
    %v70 = vpop.xlane.xlu0 %69
    %v71 = vrot.slane %v70, 4
    %v72 = vmax.f32 %v70, %v71
    %v73 = vrot.slane %v72, 2
    %v74 = vmax.f32 %v72, %v73
    %v75 = vrot.slane %v74, 1
    %v76 = vmax.f32 %v74, %v75
    %v77 = vsub.f32 %v70, %v76
    %v78 = vmul.f32 %v77, 1.442695
    %v79 = vpow.pop %v78
    %v80 = vrot.slane %v79, 4
    %v81 = vadd.f32 %v79, %v80
    %v82 = vrot.slane %v81, 2
    %v83 = vadd.f32 %v81, %v82
    %v84 = vrot.slane %v83, 1
    %v85 = vadd.f32 %v83, %v84
    %v86 = vrcp.pop %v85
    %v87 = vmul.f32 %v79, %v86
    %v88 = vmul.f32 %v87, %v36
    %v89 = vmul.f32 %v87, %v37
    %v90 = vmul.f32 %v87, %v38
    %v91 = vmul.f32 %v87, %v39
    %v92 = vrot.slane %v88, 4
    %v93 = vadd.f32 %v88, %v92
    %v94 = vrot.slane %v93, 2
    %v95 = vadd.f32 %v93, %v94
    %v96 = vrot.slane %v95, 1
    %v97 = vadd.f32 %v95, %v96
    %v98 = vrot.slane %v89, 4
    %v99 = vadd.f32 %v89, %v98
    %v100 = vrot.slane %v99, 2
    %v101 = vadd.f32 %v99, %v100
    %v102 = vrot.slane %v101, 1
    %v103 = vadd.f32 %v101, %v102
    %v104 = vrot.slane %v90, 4
    %v105 = vadd.f32 %v90, %v104
    %v106 = vrot.slane %v105, 2
    %v107 = vadd.f32 %v105, %v106
    %v108 = vrot.slane %v107, 1
    %v109 = vadd.f32 %v107, %v108
    %v110 = vrot.slane %v91, 4
    %v111 = vadd.f32 %v91, %v110
    %v112 = vrot.slane %v111, 2
    %v113 = vadd.f32 %v111, %v112
    %v114 = vrot.slane %v113, 1
    %v115 = vadd.f32 %v113, %v114
    %v116 = vadd.f32 %v97, %v45
    %v117 = vadd.f32 %v103, %v49
    %v118 = vadd.f32 %v109, %v53
    %v119 = vadd.f32 %v115, %v57
    %v124 = vcombine.low %v116, %v117
    %v125 = vcombine.low %v118, %v119
    %v127 = vunpack.c.l.s4 1966171168
    %v128 = vunpack.c.0.s8 %v127
    %v129 = vlaneseq
    %v130 = vshrl.u32 %v129, 7
    %v131 = vsub.s32 %v128, %v130
    %v132 = vrot.slane %v124, %v131
    %v134 = vunpack.c.l.s4 1966171168
    %v135 = vunpack.c.0.s8 %v134
    %v136 = vlaneseq
    %v137 = vshrl.u32 %v136, 7
    %v138 = vsub.s32 %v135, %v137
    %v139 = vrot.slane %v125, %v138
    %v140 = vcombine.low %v132, %v139
    %v142 = vunpack.c.l.s4 1966171168
    %v143 = vunpack.c.0.s8 %v142
    %v144 = vlaneseq
    %v145 = vshrl.u32 %v144, 7
    %v146 = vsub.s32 %v143, %v145
    %v147 = vrot.slane %v140, %v146
    %v149 = vlaneseq
    %vm150 = vcmp.ge.s32.totalorder %v149, 0
    %vm151 = vcmp.lt.s32.totalorder %v149, 512
    %vm152 = vmand %vm150, %vm151
    %153 = vst.msk [vmem:[#allocation7] sm:$0xf] %vm152, %v147
    // Predicated region
    $region18: #{tpu_custom_call.1} parent=1 // pred_check
      _
    $region19: #{tpu_custom_call.1} parent=1 // pred_check_branch
      %155 = sbr.rel (0) target = $region21
    $region20: #{tpu_custom_call.1} parent=1 // pred_region
      %s157 = ssub.s32 64, 64
      %158 = vsyncadd [#allocation4], %s157
      %s160 = sshll.u32 [#allocation7], 4
      %s161 = int_to_ptr.vmem [resolvable:$true] %s160
      %163 = dma.vmem_to_hbm [thread:$0]  %s161, 64, %s2, [#allocation4]
    $region21: #{tpu_custom_call.1} parent=1 // pred_fallthru
      _
    // Predicated region
    $region22: #{tpu_custom_call.1} parent=1 // pred_check
      _
    $region23: #{tpu_custom_call.1} parent=1 // pred_check_branch
      %165 = sbr.rel (0) target = $region25
    $region24: #{tpu_custom_call.1} parent=1 // pred_region
      %166 = dma.done [#allocation4], 64
    $region25: #{tpu_custom_call.1} parent=1 // pred_fallthru
      _
    %167 = vsyncpa [#allocation3], 1
    %168 = vsyncpa [#allocation6], 1
    %169 = vsyncpa [#allocation4], 1

</llo_original>
